<compile_context>
chip_gen: v6e
topology: v6e:2x2x1
jax: 0.10.0
libtpu: 0.0.40
codegen_flags: <defaults>
</compile_context>

<pallas_src>
import functools

import jax
import jax.numpy as jnp
from jax.experimental import pallas as pl
from jax.experimental.pallas import tpu as pltpu


# ----------------------------- kernels --------------------------------------

def _linear_kernel_acc(x_ref, w_ref, o_ref, acc_ref):
    """Tiled y = x @ w with a K-resident f32 accumulator (grid = (M, N, K))."""
    @pl.when(pl.program_id(2) == 0)
    def _init():
        acc_ref[...] = jnp.zeros_like(acc_ref)

    acc_ref[...] += jnp.dot(
        x_ref[...], w_ref[...], preferred_element_type=jnp.float32
    )

    @pl.when(pl.program_id(2) == pl.num_programs(2) - 1)
    def _store():
        o_ref[...] = acc_ref[...].astype(o_ref.dtype)


def _linear_kernel_single(x_ref, w_ref, o_ref):
    """Single-K-step fast path: no scratch, no predicated init / epilogue."""
    o_ref[...] = jnp.dot(
        x_ref[...], w_ref[...], preferred_element_type=jnp.float32
    ).astype(o_ref.dtype)


# ----------------------------- helpers --------------------------------------

def _round_up(x, m):
    return ((x + m - 1) // m) * m


def _pick_divisor_tile(dim, candidates):
    """Largest candidate that divides `dim` (dim is already 128-aligned)."""
    for t in candidates:
        if dim % t == 0:
            return t
    return candidates[-1]


def _vmem_limit_bytes():
    """Generation-aware scoped-VMEM budget."""
    cap = None
    try:
        cap = pltpu.get_tpu_info().vmem_capacity_bytes
    except Exception:
        cap = None
    if cap is None:
        # Unknown part: stay safe for the smallest (v7x, 64 MiB) generation.
        return 48 * 1024 * 1024
    if cap <= 64 * 1024 * 1024:
        # v7x-class: 64 MiB physical -> leave headroom for compiler scratch.
        return min(cap - 12 * 1024 * 1024, 48 * 1024 * 1024)
    # v5e / v6e: 128 MiB physical.
    return 96 * 1024 * 1024


# ----------------------------- layer ----------------------------------------

def make_simple_layer(weight, compute_dtype=jnp.bfloat16):
    """One-time parameter prep for y = x @ weight.T (nn.Linear, bias=False).

    weight: (C_out, C_in) float32, PyTorch layout.
    Returns forward(x) computing the same result as nn.Linear(bias=False).
    """
    n_out, k_in = weight.shape
    sub = 16 if jnp.dtype(compute_dtype).itemsize == 2 else 8

    # ---- tile selection for the K (contraction) and N (output-lane) axes ----
    kp = _round_up(k_in, 128)
    tk = _pick_divisor_tile(kp, (2048, 1024, 512, 256, 128))

    np_ = _round_up(n_out, 128)
    if np_ <= 128:
        tn = np_
    else:
        tn = _pick_divisor_tile(np_, (512, 384, 256, 128))
        if np_ // tn < 2:
            # Guarantee >=2 parallel N blocks so v7x's second TensorCore has
            # work even when the batch fits a single M block.
            tn = _pick_divisor_tile(np_, (256, 128))

    # ---- one-time weight re-layout: (C_out, C_in) -> padded (K, N), bf16 ----
    w_kn = weight.T.astype(compute_dtype)
    w_kn = jnp.pad(w_kn, ((0, kp - k_in), (0, np_ - n_out)))
    w_kn = jax.device_put(w_kn)

    vmem_limit = _vmem_limit_bytes()

    def forward(x):
        orig_dtype = x.dtype
        lead = x.shape[:-1]
        assert x.shape[-1] == k_in, "channel_in mismatch between x and weight"
        x2 = x.reshape((-1, k_in))
        m = x2.shape[0]

        # ---- M tile: only the (small) activation is padded per call ----
        mp_a = _round_up(m, sub)
        if mp_a <= 512:
            tm = mp_a
        else:
            tm = _pick_divisor_tile(_round_up(mp_a, 128), (512, 256, 128))
        mp = _round_up(m, tm)

        x_p = x2.astype(compute_dtype)
        if mp != m or kp != k_in:
            x_p = jnp.pad(x_p, ((0, mp - m), (0, kp - k_in)))

        grid_k = kp // tk
        cost = pl.CostEstimate(
            flops=2 * m * n_out * k_in,
            transcendentals=0,
            bytes_accessed=(mp * kp + kp * np_) * 2 + mp * np_ * 4,
        )

        if grid_k == 1:
            # Fast path: whole K in one block, no accumulator needed.
            out_p = pl.pallas_call(
                _linear_kernel_single,
                out_shape=jax.ShapeDtypeStruct((mp, np_), jnp.float32),
                grid_spec=pltpu.PrefetchScalarGridSpec(
                    num_scalar_prefetch=0,
                    grid=(mp // tm, np_ // tn),
                    in_specs=[
                        pl.BlockSpec((tm, kp), lambda i, j: (i, 0)),
                        pl.BlockSpec((kp, tn), lambda i, j: (0, j)),
                    ],
                    out_specs=pl.BlockSpec((tm, tn), lambda i, j: (i, j)),
                ),
                compiler_params=pltpu.CompilerParams(
                    dimension_semantics=("parallel", "parallel"),
                    vmem_limit_bytes=vmem_limit,
                ),
                cost_estimate=cost,
            )(x_p, w_kn)
        else:
            out_p = pl.pallas_call(
                _linear_kernel_acc,
                out_shape=jax.ShapeDtypeStruct((mp, np_), jnp.float32),
                grid_spec=pltpu.PrefetchScalarGridSpec(
                    num_scalar_prefetch=0,
                    grid=(mp // tm, np_ // tn, grid_k),
                    in_specs=[
                        pl.BlockSpec((tm, tk), lambda i, j, k: (i, k)),
                        pl.BlockSpec((tk, tn), lambda i, j, k: (k, j)),
                    ],
                    out_specs=pl.BlockSpec((tm, tn), lambda i, j, k: (i, j)),
                    scratch_shapes=[pltpu.VMEM((tm, tn), jnp.float32)],
                ),
                compiler_params=pltpu.CompilerParams(
                    dimension_semantics=("parallel", "parallel", "arbitrary"),
                    vmem_limit_bytes=vmem_limit,
                ),
                cost_estimate=cost,
            )(x_p, w_kn)

        out = out_p[:m, :n_out].astype(orig_dtype)
        return out.reshape((*lead, n_out))

    return forward


# ----------------------------- demo / check ---------------------------------

if __name__ == "__main__":
    key = jax.random.PRNGKey(0)
    kx, kw = jax.random.split(key)

    batch = 8
    channel_in = 32
    channel_out = 16

    x = jax.random.normal(kx, (batch, channel_in), dtype=jnp.float32)
    # Deterministic weight mimicking nn.Linear's uniform(-1/sqrt(in), 1/sqrt(in))
    bound = 1.0 / (channel_in ** 0.5)
    weight = jax.random.uniform(
        kw, (channel_out, channel_in), dtype=jnp.float32,
        minval=-bound, maxval=bound,
    )

    layer = make_simple_layer(weight)           # one-time weight re-layout
    y = layer(x)
    jax.block_until_ready(y)

    # Reference: PyTorch nn.Linear(bias=False) semantics in f32.
    y_ref = x @ weight.T
    assert y.shape == (batch, channel_out)
    # bf16 operands + f32 accumulation -> bf16-level tolerance vs f32 reference.
    assert jnp.allclose(y, y_ref, atol=5e-2, rtol=5e-2)

    print("KERNEL_OK")
</pallas_src>

<mosaic_0001>
module attributes {stable_mosaic.version = 11 : i64} {
  func.func @_linear_kernel_single(%arg0: i32, %arg1: i32, %arg2: memref<16x128xbf16, #tpu.memory_space<vmem>>, %arg3: memref<128x128xbf16, #tpu.memory_space<vmem>>, %arg4: memref<16x128xf32, #tpu.memory_space<vmem>>) attributes {dimension_semantics = [#tpu.dimension_semantics<parallel>, #tpu.dimension_semantics<parallel>], iteration_bounds = array<i64: 1, 1>, scalar_prefetch = 0 : i64, scratch_operands = 0 : i64, tpu.core_type = #tpu.core_type<tc>, window_params = [{transform_indices = @transform_0, window_bounds = array<i64: 16, 128>}, {transform_indices = @transform_1, window_bounds = array<i64: 128, 128>}, {transform_indices = @transform_2, window_bounds = array<i64: 16, 128>}]} {
    %c0 = arith.constant 0 : index
    %c0_0 = arith.constant 0 : index
    %0 = vector.load %arg2[%c0, %c0_0] : memref<16x128xbf16, #tpu.memory_space<vmem>>, vector<16x128xbf16>
    %c0_1 = arith.constant 0 : index
    %c0_2 = arith.constant 0 : index
    %1 = vector.load %arg3[%c0_1, %c0_2] : memref<128x128xbf16, #tpu.memory_space<vmem>>, vector<128x128xbf16>
    %cst = arith.constant dense<0.000000e+00> : vector<16x128xf32>
    %2 = tpu.matmul %0, %1, %cst {dimension_numbers = #tpu.dot_dimension_numbers<[1], [0], [0], [1], [0, 0, 1, 1], [], []>} : vector<16x128xbf16>, vector<128x128xbf16>, vector<16x128xf32> -> vector<16x128xf32>
    %c0_3 = arith.constant 0 : index
    %c0_4 = arith.constant 0 : index
    %3 = vector.load %arg4[%c0_3, %c0_4] : memref<16x128xf32, #tpu.memory_space<vmem>>, vector<16x128xf32>
    tpu.vector_store %arg4[%c0_3, %c0_4], %2 {strides = array<i32>} : memref<16x128xf32, #tpu.memory_space<vmem>>, vector<16x128xf32>,
    return
  }
  func.func @transform_0(%arg0: i32, %arg1: i32) -> (i32, i32) {
    %c0_i32 = arith.constant 0 : i32
    %c0_i32_0 = arith.constant 0 : i32
    return %arg0, %c0_i32 : i32, i32
  }
  func.func @transform_1(%arg0: i32, %arg1: i32) -> (i32, i32) {
    %c0_i32 = arith.constant 0 : i32
    %c0_i32_0 = arith.constant 0 : i32
    return %c0_i32, %arg1 : i32, i32
  }
  func.func @transform_2(%arg0: i32, %arg1: i32) -> (i32, i32) {
    %c0_i32 = arith.constant 0 : i32
    return %arg0, %arg1 : i32, i32
  }
}

</mosaic_0001>

<llo_original>
// kernel: tpu_custom_call.1
$region0: #{tpu_custom_call.1}
  #allocation0 [shape = 'u32[]', space=smem, size = 0x4, offset = 0x4, fixed_abs, tag = 'smem constant byte address 0x4 - core index']
  #allocation1 [shape = 'u32[144,128]{1,0:T(1,128)}', space=vmem, size = 0x12000, scoped, tag = 'internal scratch']
  %s0 = inlined_call_operand.hbm [shape: bf16[16,128], index: 0, kind: input, shape index: {}]
  %s1 = inlined_call_operand.hbm [shape: bf16[128,128], index: 1, kind: input, shape index: {}]
  %s2 = inlined_call_operand.hbm [shape: f32[16,128], index: 2, kind: output, shape index: {}]
  %s3 = sld [smem:[#allocation0]]
  $region26: #{tpu_custom_call.1} parent=0
    _
  %s5 = ssub.s32 1, %s3
  %s6 = scalar_select 0, %s5, %s3
  $region1: #{tpu_custom_call.1} parent=0
    #allocation2 [shape = 'u8[4096]{0}', space=vmem, size = 0x1000, scoped, tag = 'input window, operand 0, single buffered']
    #allocation3 [shape = 's32[1]{0}', space=sflag, size = 0x4, scoped, tag = 'scoped memory for tpu_custom_call.1']
    #allocation4 [shape = 's32[1]{0}', space=sflag, size = 0x4, scoped, tag = 'scoped memory for tpu_custom_call.1']
    #allocation5 [shape = 'u8[32768]{0}', space=vmem, size = 0x8000, scoped, tag = 'input window, operand 1, single buffered']
    #allocation6 [shape = 's32[1]{0}', space=sflag, size = 0x4, scoped, tag = 'scoped memory for tpu_custom_call.1']
    #allocation7 [shape = 'u8[8192]{0}', space=vmem, size = 0x2000, scoped, tag = 'output window, operand 0, single buffered']
    %7 = vsyncpa [#allocation3], 0
    %8 = vsyncpa [#allocation6], 0
    %9 = vsyncpa [#allocation4], 0
    // Predicated region
    $region2: #{tpu_custom_call.1} parent=1 // pred_check
      _
    $region3: #{tpu_custom_call.1} parent=1 // pred_check_branch
      %11 = sbr.rel (0) target = $region5
    $region4: #{tpu_custom_call.1} parent=1 // pred_region
      %s13 = ssub.s32 128, 128
      %14 = vsyncadd [#allocation3], %s13
      %s15 = sshll.u32 [#allocation2], 4
      %s16 = int_to_ptr.vmem [resolvable:$true] %s15
      %21 = dma.hbm_to_vmem [thread:$0]  %s0, 128, %s16, [#allocation3], 64, 64, 4
    $region5: #{tpu_custom_call.1} parent=1 // pred_fallthru
      _
    // Predicated region
    $region6: #{tpu_custom_call.1} parent=1 // pred_check
      _
    $region7: #{tpu_custom_call.1} parent=1 // pred_check_branch
      %23 = sbr.rel (0) target = $region9
    $region8: #{tpu_custom_call.1} parent=1 // pred_region
      %s25 = ssub.s32 1024, 1024
      %26 = vsyncadd [#allocation6], %s25
      %s27 = sshll.u32 [#allocation5], 4
      %s28 = int_to_ptr.vmem [resolvable:$true] %s27
      %33 = dma.hbm_to_vmem [thread:$0]  %s1, 1024, %s28, [#allocation6], 64, 64, 4
    $region9: #{tpu_custom_call.1} parent=1 // pred_fallthru
      _
    // Predicated region
    $region10: #{tpu_custom_call.1} parent=1 // pred_check
      _
    $region11: #{tpu_custom_call.1} parent=1 // pred_check_branch
      %35 = sbr.rel (0) target = $region13
    $region12: #{tpu_custom_call.1} parent=1 // pred_region
      %36 = dma.done [#allocation3], 128
    $region13: #{tpu_custom_call.1} parent=1 // pred_fallthru
      _
    // Predicated region
    $region14: #{tpu_custom_call.1} parent=1 // pred_check
      _
    $region15: #{tpu_custom_call.1} parent=1 // pred_check_branch
      %38 = sbr.rel (0) target = $region17
    $region16: #{tpu_custom_call.1} parent=1 // pred_region
      %39 = dma.done [#allocation6], 1024
    $region17: #{tpu_custom_call.1} parent=1 // pred_fallthru
      _
    %v41 = vld [vmem:[#allocation2] sm:$0xf]
    %v42 = vld [vmem:[#allocation2 + $0x4] sm:$0xf]
    %v43 = vld [vmem:[#allocation5] sm:$0xf]
    %v44 = vld [vmem:[#allocation5 + $0x4] sm:$0xf]
    %v45 = vld [vmem:[#allocation5 + $0x8] sm:$0xf]
    %v46 = vld [vmem:[#allocation5 + $0xc] sm:$0xf]
    %v47 = vld [vmem:[#allocation5 + $0x10] sm:$0xf]
    %v48 = vld [vmem:[#allocation5 + $0x14] sm:$0xf]
    %v49 = vld [vmem:[#allocation5 + $0x18] sm:$0xf]
    %v50 = vld [vmem:[#allocation5 + $0x1c] sm:$0xf]
    %v51 = vld [vmem:[#allocation5 + $0x20] sm:$0xf]
    %v52 = vld [vmem:[#allocation5 + $0x24] sm:$0xf]
    %v53 = vld [vmem:[#allocation5 + $0x28] sm:$0xf]
    %v54 = vld [vmem:[#allocation5 + $0x2c] sm:$0xf]
    %v55 = vld [vmem:[#allocation5 + $0x30] sm:$0xf]
    %v56 = vld [vmem:[#allocation5 + $0x34] sm:$0xf]
    %v57 = vld [vmem:[#allocation5 + $0x38] sm:$0xf]
    %v58 = vld [vmem:[#allocation5 + $0x3c] sm:$0xf]
    %v61 = vunpack.c.l.b16 %v41
    %v62 = vunpack.c.l.b16 %v42
    %v63 = vpack.c.b16 %v62, %v61
    %v81 = vunpack.c.l.b16 %v43
    %v82 = vunpack.c.l.b16 %v44
    %v83 = vunpack.c.l.b16 %v45
    %v84 = vunpack.c.l.b16 %v46
    %v85 = vunpack.c.l.b16 %v47
    %v86 = vunpack.c.l.b16 %v48
    %v87 = vunpack.c.l.b16 %v49
    %v88 = vunpack.c.l.b16 %v50
    %v89 = vunpack.c.l.b16 %v51
    %v90 = vunpack.c.l.b16 %v52
    %v91 = vunpack.c.l.b16 %v53
    %v92 = vunpack.c.l.b16 %v54
    %v93 = vunpack.c.l.b16 %v55
    %v94 = vunpack.c.l.b16 %v56
    %v95 = vunpack.c.l.b16 %v57
    %v96 = vunpack.c.l.b16 %v58
    %v97 = vpack.c.b16 %v82, %v81
    %v98 = vpack.c.b16 %v84, %v83
    %v99 = vpack.c.b16 %v86, %v85
    %v100 = vpack.c.b16 %v88, %v87
    %v101 = vpack.c.b16 %v90, %v89
    %v102 = vpack.c.b16 %v92, %v91
    %v103 = vpack.c.b16 %v94, %v93
    %v104 = vpack.c.b16 %v96, %v95
    %113 = vmatprep.subr.bf16.mxu0 0
    %114 = vmatpush1.bf16.msra.mxu0 %v104
    %115 = vmatprep.subr.bf16.mxu0 0
    %116 = vmatpush1.bf16.msra.mxu0 %v103
    %117 = vmatprep.subr.bf16.mxu0 0
    %118 = vmatpush1.bf16.msra.mxu0 %v102
    %119 = vmatprep.subr.bf16.mxu0 0
    %120 = vmatpush1.bf16.msra.mxu0 %v101
    %121 = vmatprep.subr.bf16.mxu0 0
    %122 = vmatpush1.bf16.msra.mxu0 %v100
    %123 = vmatprep.subr.bf16.mxu0 0
    %124 = vmatpush1.bf16.msra.mxu0 %v99
    %125 = vmatprep.subr.bf16.mxu0 0
    %126 = vmatpush1.bf16.msra.mxu0 %v98
    %127 = vmatprep.subr.bf16.mxu0 0
    %128 = vmatpush1.bf16.msra.mxu0 %v97
    %129 = vmatprep.subr.bf16.mxu0 0
    %130 = vmatpush2.bf16.msra.mxu0 0
    %131 = vmatprep.subr.bf16.mxu0 0
    %132 = vmatpush2.bf16.msra.mxu0 0
    %133 = vmatprep.subr.bf16.mxu0 0
    %134 = vmatpush2.bf16.msra.mxu0 0
    %135 = vmatprep.subr.bf16.mxu0 0
    %136 = vmatpush2.bf16.msra.mxu0 0
    %137 = vmatprep.subr.bf16.mxu0 0
    %138 = vmatpush2.bf16.msra.mxu0 0
    %139 = vmatprep.subr.bf16.mxu0 0
    %140 = vmatpush2.bf16.msra.mxu0 0
    %141 = vmatprep.subr.bf16.mxu0 0
    %142 = vmatpush2.bf16.msra.mxu0 0
    %143 = vmatprep.subr.bf16.mxu0 0
    %144 = vmatpush2.bf16.msra.mxu0 0
    %145 = vmatprep.mubr.bf16.mxu0 0
    %146 = vmatmul.mubr.bf16.gmra.mxu0 %v63
    %v147 = vpop.f32.mrf.mxu0
    %v148 = vadd.f32 0.0, %v147
    %v149 = vpop.f32.mrf.mxu0
    %v150 = vpop.f32.mrf.mxu0
    %v151 = vadd.f32 0.0, %v150
    %v152 = vpop.f32.mrf.mxu0
    %153 = vdwg.mxu0
    %154 = vst [vmem:[#allocation7] sm:$0xff] %v148
    %155 = vst [vmem:[#allocation7 + $0x8] sm:$0xff] %v151
    // Predicated region
    $region18: #{tpu_custom_call.1} parent=1 // pred_check
      _
    $region19: #{tpu_custom_call.1} parent=1 // pred_check_branch
      %157 = sbr.rel (0) target = $region21
    $region20: #{tpu_custom_call.1} parent=1 // pred_region
      %s159 = ssub.s32 256, 256
      %160 = vsyncadd [#allocation4], %s159
      %s161 = sshll.u32 [#allocation7], 4
      %s162 = int_to_ptr.vmem [resolvable:$true] %s161
      %167 = dma.vmem_to_hbm [thread:$0]  %s162, 256, %s2, [#allocation4], 128, 128, 8
    $region21: #{tpu_custom_call.1} parent=1 // pred_fallthru
      _
    // Predicated region
    $region22: #{tpu_custom_call.1} parent=1 // pred_check
      _
    $region23: #{tpu_custom_call.1} parent=1 // pred_check_branch
      %169 = sbr.rel (0) target = $region25
    $region24: #{tpu_custom_call.1} parent=1 // pred_region
      %170 = dma.done [#allocation4], 256
    $region25: #{tpu_custom_call.1} parent=1 // pred_fallthru
      _
    %171 = vsyncpa [#allocation3], 1
    %172 = vsyncpa [#allocation6], 1
    %173 = vsyncpa [#allocation4], 1

</llo_original>
